<compile_context>
chip_gen: v7x
topology: tpu7x:2x2x1
jax: 0.10.0
libtpu: 0.0.40
codegen_flags: <defaults>
</compile_context>

<pallas_src>
import jax
import jax.numpy as jnp
from jax.experimental import pallas as pl
from jax.experimental.pallas import tpu as pltpu

_LANES = 128
_ACC_ROWS = 32          # (32,128) partial = 4 independent accumulator vregs (ILP)
_TILE_ROWS = 8192       # 4 MiB f32 per input per block; 16 MiB double-buffered
_SENTINEL = 1.0e4       # exp(-1e4) underflows to 0 in f32 -> softplus(-1e4) == 0
_SPLIT_MIN_ROWS = 1024  # only force >=2 grid steps (v7x megacore) above ~0.5 MiB/input


def _softplus(x):
    # Numerically stable softplus == per-element BCEWithLogits contribution.
    return jnp.maximum(x, 0.0) + jnp.log1p(jnp.exp(-jnp.abs(x)))


def _dloss_kernel(fake_ref, real_ref, fpart_ref, rpart_ref):
    f = fake_ref[...].astype(jnp.float32)
    r = real_ref[...].astype(jnp.float32)

    # fake target = 0 -> softplus(x); real target = 1 -> softplus(-x).
    # Padding is sentinel-valued (-1e4 for fake, +1e4 for real) so both terms
    # are exactly 0 on pad elements: no per-element mask needed.
    f_c = _softplus(f)
    r_c = _softplus(-r)

    # Fold (block_rows,128) -> (32,128) with pure elementwise VPU adds across
    # 4 independent vreg accumulators (sublane-split reshape is layout-free).
    fpart_ref[0] = jnp.sum(f_c.reshape(-1, _ACC_ROWS, _LANES), axis=0)
    rpart_ref[0] = jnp.sum(r_c.reshape(-1, _ACC_ROWS, _LANES), axis=0)


def _choose_block_rows(rows):
    """rows is a multiple of _ACC_ROWS; returns block_rows (mult. of _ACC_ROWS)."""
    if rows <= _SPLIT_MIN_ROWS:
        return min(rows, _TILE_ROWS)
    # >= 2 grid steps so "parallel" actually shards across both v7x TCs.
    n_steps = max(2, pl.cdiv(rows, _TILE_ROWS))
    br = pl.cdiv(rows, n_steps)
    br = pl.cdiv(br, _ACC_ROWS) * _ACC_ROWS
    return min(br, _TILE_ROWS)


def _as_slab(x, rows, sentinel):
    """Flatten to a lane-dense (rows, 128) slab, sentinel-padded to grid size."""
    flat = x.reshape(-1)
    pad = rows * _LANES - flat.shape[0]
    if pad:
        flat = jnp.pad(flat, (0, pad), constant_values=sentinel)
    return flat.reshape(rows, _LANES)


def dloss(fake_pred, real_pred):
    assert fake_pred.shape == real_pred.shape, "fake_pred/real_pred shape mismatch"
    n = int(fake_pred.size)

    rows_min = pl.cdiv(n, _LANES)
    rows_min = pl.cdiv(rows_min, _ACC_ROWS) * _ACC_ROWS
    block_rows = _choose_block_rows(rows_min)
    grid_len = pl.cdiv(rows_min, block_rows)
    rows = grid_len * block_rows  # slabs padded to full grid: no ragged blocks

    fake2d = _as_slab(fake_pred, rows, -_SENTINEL)  # softplus(-1e4)   == 0
    real2d = _as_slab(real_pred, rows, _SENTINEL)   # softplus(-(1e4)) == 0

    in_bytes = fake2d.size * fake2d.dtype.itemsize + real2d.size * real2d.dtype.itemsize
    out_bytes = 2 * grid_len * _ACC_ROWS * _LANES * 4
    cost = pl.CostEstimate(
        flops=12 * n,              # ~6 VPU flops per element per input
        transcendentals=4 * n,     # exp + log1p per element per input
        bytes_accessed=in_bytes + out_bytes,
    )

    fparts, rparts = pl.pallas_call(
        _dloss_kernel,
        out_shape=(
            jax.ShapeDtypeStruct((grid_len, _ACC_ROWS, _LANES), jnp.float32),
            jax.ShapeDtypeStruct((grid_len, _ACC_ROWS, _LANES), jnp.float32),
        ),
        grid_spec=pltpu.PrefetchScalarGridSpec(
            num_scalar_prefetch=0,
            grid=(grid_len,),
            in_specs=[
                pl.BlockSpec((block_rows, _LANES), lambda i: (i, 0)),
                pl.BlockSpec((block_rows, _LANES), lambda i: (i, 0)),
            ],
            out_specs=[
                pl.BlockSpec((1, _ACC_ROWS, _LANES), lambda i: (i, 0, 0)),
                pl.BlockSpec((1, _ACC_ROWS, _LANES), lambda i: (i, 0, 0)),
            ],
        ),
        compiler_params=pltpu.CompilerParams(
            dimension_semantics=("parallel",),        # megacore-shardable on v7x
            vmem_limit_bytes=32 * 1024 * 1024,        # fits v5e scoped / v7x physical
        ),
        cost_estimate=cost,
    )(fake2d, real2d)

    # Tiny final reduction (grid * 32 * 128 f32 values) done in JAX.
    inv_n = 1.0 / jnp.float32(n)
    fake_mean = jnp.sum(fparts) * inv_n
    real_mean = jnp.sum(rparts) * inv_n
    return (fake_mean + real_mean) * 0.5


def _dloss_ref(fake_pred, real_pred):
    sp = jax.nn.softplus
    return (jnp.mean(sp(fake_pred)) + jnp.mean(sp(-real_pred))) * 0.5


if __name__ == "__main__":
    key = jax.random.PRNGKey(0)
    k1, k2 = jax.random.split(key)
    # Discriminator logits, NCHW-shaped patches: (B=2, C=4, H=16, W=16)
    fake_pred = jax.random.normal(k1, (2, 4, 16, 16), dtype=jnp.float32)
    real_pred = jax.random.normal(k2, (2, 4, 16, 16), dtype=jnp.float32)

    loss = jax.block_until_ready(dloss(fake_pred, real_pred))
    ref = _dloss_ref(fake_pred, real_pred)

    assert jnp.allclose(loss, ref, atol=1e-5, rtol=1e-5), (loss, ref)
    print("KERNEL_OK")
</pallas_src>

<mosaic_0001>
module attributes {stable_mosaic.version = 11 : i64} {
  func.func @_dloss_kernel(%arg0: i32, %arg1: memref<32x128xf32, #tpu.memory_space<vmem>>, %arg2: memref<32x128xf32, #tpu.memory_space<vmem>>, %arg3: memref<1x32x128xf32, #tpu.memory_space<vmem>>, %arg4: memref<1x32x128xf32, #tpu.memory_space<vmem>>) attributes {dimension_semantics = [#tpu.dimension_semantics<parallel>], iteration_bounds = array<i64: 1>, scalar_prefetch = 0 : i64, scratch_operands = 0 : i64, tpu.core_type = #tpu.core_type<tc>, window_params = [{transform_indices = @transform_0, window_bounds = array<i64: 32, 128>}, {transform_indices = @transform_1, window_bounds = array<i64: 32, 128>}, {transform_indices = @transform_2, window_bounds = array<i64: 1, 32, 128>}, {transform_indices = @transform_3, window_bounds = array<i64: 1, 32, 128>}]} {
    %c0 = arith.constant 0 : index
    %c0_0 = arith.constant 0 : index
    %0 = vector.load %arg1[%c0, %c0_0] : memref<32x128xf32, #tpu.memory_space<vmem>>, vector<32x128xf32>
    %c0_1 = arith.constant 0 : index
    %c0_2 = arith.constant 0 : index
    %1 = vector.load %arg2[%c0_1, %c0_2] : memref<32x128xf32, #tpu.memory_space<vmem>>, vector<32x128xf32>
    %cst = arith.constant 0.000000e+00 : f32
    %2 = vector.broadcast %cst : f32 to vector<32x128xf32>
    %3 = arith.maximumf %0, %2 : vector<32x128xf32>
    %4 = math.absf %0 : vector<32x128xf32>
    %cst_3 = arith.constant 0.000000e+00 : f32
    %5 = vector.broadcast %cst_3 : f32 to vector<32x128xf32>
    %6 = arith.subf %5, %4 : vector<32x128xf32>
    %7 = math.exp %6 : vector<32x128xf32>
    %8 = math.log1p %7 : vector<32x128xf32>
    %9 = arith.addf %3, %8 : vector<32x128xf32>
    %cst_4 = arith.constant 0.000000e+00 : f32
    %10 = vector.broadcast %cst_4 : f32 to vector<32x128xf32>
    %11 = arith.subf %10, %1 : vector<32x128xf32>
    %cst_5 = arith.constant 0.000000e+00 : f32
    %12 = vector.broadcast %cst_5 : f32 to vector<32x128xf32>
    %13 = arith.maximumf %11, %12 : vector<32x128xf32>
    %14 = math.absf %11 : vector<32x128xf32>
    %cst_6 = arith.constant 0.000000e+00 : f32
    %15 = vector.broadcast %cst_6 : f32 to vector<32x128xf32>
    %16 = arith.subf %15, %14 : vector<32x128xf32>
    %17 = math.exp %16 : vector<32x128xf32>
    %18 = math.log1p %17 : vector<32x128xf32>
    %19 = arith.addf %13, %18 : vector<32x128xf32>
    %20 = vector.shape_cast %9 : vector<32x128xf32> to vector<1x32x128xf32>
    %cst_7 = arith.constant dense<0.000000e+00> : vector<32x128xf32>
    %21 = vector.multi_reduction <add>, %20, %cst_7 [0] : vector<1x32x128xf32> to vector<32x128xf32>
    %c0_8 = arith.constant 0 : index
    %c0_9 = arith.constant 0 : index
    %c0_10 = arith.constant 0 : index
    %22 = vector.load %arg3[%c0_8, %c0_9, %c0_10] : memref<1x32x128xf32, #tpu.memory_space<vmem>>, vector<1x32x128xf32>
    %23 = vector.shape_cast %22 : vector<1x32x128xf32> to vector<32x128xf32>
    %24 = vector.shape_cast %21 : vector<32x128xf32> to vector<1x32x128xf32>
    tpu.vector_store %arg3[%c0_8, %c0_9, %c0_10], %24 {strides = array<i32>} : memref<1x32x128xf32, #tpu.memory_space<vmem>>, vector<1x32x128xf32>,
    %25 = vector.shape_cast %19 : vector<32x128xf32> to vector<1x32x128xf32>
    %cst_11 = arith.constant dense<0.000000e+00> : vector<32x128xf32>
    %26 = vector.multi_reduction <add>, %25, %cst_11 [0] : vector<1x32x128xf32> to vector<32x128xf32>
    %c0_12 = arith.constant 0 : index
    %c0_13 = arith.constant 0 : index
    %c0_14 = arith.constant 0 : index
    %27 = vector.load %arg4[%c0_12, %c0_13, %c0_14] : memref<1x32x128xf32, #tpu.memory_space<vmem>>, vector<1x32x128xf32>
    %28 = vector.shape_cast %27 : vector<1x32x128xf32> to vector<32x128xf32>
    %29 = vector.shape_cast %26 : vector<32x128xf32> to vector<1x32x128xf32>
    tpu.vector_store %arg4[%c0_12, %c0_13, %c0_14], %29 {strides = array<i32>} : memref<1x32x128xf32, #tpu.memory_space<vmem>>, vector<1x32x128xf32>,
    return
  }
  func.func @transform_0(%arg0: i32) -> (i32, i32) {
    %c0_i32 = arith.constant 0 : i32
    %c0_i32_0 = arith.constant 0 : i32
    return %arg0, %c0_i32 : i32, i32
  }
  func.func @transform_1(%arg0: i32) -> (i32, i32) {
    %c0_i32 = arith.constant 0 : i32
    %c0_i32_0 = arith.constant 0 : i32
    return %arg0, %c0_i32 : i32, i32
  }
  func.func @transform_2(%arg0: i32) -> (i32, i32, i32) {
    %c0_i32 = arith.constant 0 : i32
    %c0_i32_0 = arith.constant 0 : i32
    %c0_i32_1 = arith.constant 0 : i32
    return %arg0, %c0_i32, %c0_i32_0 : i32, i32, i32
  }
  func.func @transform_3(%arg0: i32) -> (i32, i32, i32) {
    %c0_i32 = arith.constant 0 : i32
    %c0_i32_0 = arith.constant 0 : i32
    %c0_i32_1 = arith.constant 0 : i32
    return %arg0, %c0_i32, %c0_i32_0 : i32, i32, i32
  }
}

</mosaic_0001>

<llo_original>
// kernel: tpu_custom_call.1
$region0: #{tpu_custom_call.1}
  #allocation0 [shape = 'u32[]', space=smem, size = 0x4, offset = 0x4, fixed_abs, tag = 'smem constant byte address 0x4 - core index']
  #allocation1 [shape = 'u32[144,128]{1,0:T(1,128)}', space=vmem, size = 0x12000, scoped, tag = 'internal scratch']
  %s0 = inlined_call_operand.hbm [shape: f32[32,128], index: 0, kind: input, shape index: {}]
  %s1 = inlined_call_operand.hbm [shape: f32[32,128], index: 1, kind: input, shape index: {}]
  %s2 = inlined_call_operand.hbm [shape: f32[1,32,128], index: 2, kind: output, shape index: {0}]
  %s3 = inlined_call_operand.hbm [shape: f32[1,32,128], index: 3, kind: output, shape index: {1}]
  %4 = xla_tuple %s2, %s3
  %s5 = sld [smem:[#allocation0]]
  $region34: #{tpu_custom_call.1} parent=0
    _
  %s7 = ssub.s32 1, %s5
  %s8 = scalar_select 0, %s7, %s5
  $region1: #{tpu_custom_call.1} parent=0
    #allocation2 [shape = 'u8[16384]{0}', space=vmem, size = 0x4000, scoped, tag = 'input window, operand 0, single buffered']
    #allocation3 [shape = 's32[1]{0}', space=sflag, size = 0x4, scoped, tag = 'scoped memory for tpu_custom_call.1']
    #allocation4 [shape = 's32[1]{0}', space=sflag, size = 0x4, scoped, tag = 'scoped memory for tpu_custom_call.1']
    #allocation5 [shape = 'u8[16384]{0}', space=vmem, size = 0x4000, scoped, tag = 'input window, operand 1, single buffered']
    #allocation6 [shape = 's32[1]{0}', space=sflag, size = 0x4, scoped, tag = 'scoped memory for tpu_custom_call.1']
    #allocation7 [shape = 'u8[16384]{0}', space=vmem, size = 0x4000, scoped, tag = 'output window, operand 0, single buffered']
    #allocation8 [shape = 'u8[16384]{0}', space=vmem, size = 0x4000, scoped, tag = 'output window, operand 1, single buffered']
    #allocation9 [shape = 's32[1]{0}', space=sflag, size = 0x4, scoped, tag = 'scoped memory for tpu_custom_call.1']
    %9 = vsyncpa [#allocation3], 0
    %10 = vsyncpa [#allocation6], 0
    %11 = vsyncpa [#allocation4], 0
    %12 = vsyncpa [#allocation9], 0
    // Predicated region
    $region2: #{tpu_custom_call.1} parent=1 // pred_check
      _
    $region3: #{tpu_custom_call.1} parent=1 // pred_check_branch
      %14 = sbr.rel (0) target = $region5
    $region4: #{tpu_custom_call.1} parent=1 // pred_region
      %s16 = ssub.s32 512, 512
      %17 = vsyncadd [#allocation3], %s16
      %s18 = sshll.u32 [#allocation2], 4
      %s19 = int_to_ptr.vmem [resolvable:$true] %s18
      %24 = dma.hbm_to_vmem [thread:$0]  %s0, 512, %s19, [#allocation3], 128, 128, 8
    $region5: #{tpu_custom_call.1} parent=1 // pred_fallthru
      _
    // Predicated region
    $region6: #{tpu_custom_call.1} parent=1 // pred_check
      _
    $region7: #{tpu_custom_call.1} parent=1 // pred_check_branch
      %26 = sbr.rel (0) target = $region9
    $region8: #{tpu_custom_call.1} parent=1 // pred_region
      %s28 = ssub.s32 512, 512
      %29 = vsyncadd [#allocation6], %s28
      %s30 = sshll.u32 [#allocation5], 4
      %s31 = int_to_ptr.vmem [resolvable:$true] %s30
      %36 = dma.hbm_to_vmem [thread:$0]  %s1, 512, %s31, [#allocation6], 128, 128, 8
    $region9: #{tpu_custom_call.1} parent=1 // pred_fallthru
      _
    // Predicated region
    $region10: #{tpu_custom_call.1} parent=1 // pred_check
      _
    $region11: #{tpu_custom_call.1} parent=1 // pred_check_branch
      %38 = sbr.rel (0) target = $region13
    $region12: #{tpu_custom_call.1} parent=1 // pred_region
      %39 = dma.done [#allocation3], 512
    $region13: #{tpu_custom_call.1} parent=1 // pred_fallthru
      _
    // Predicated region
    $region14: #{tpu_custom_call.1} parent=1 // pred_check
      _
    $region15: #{tpu_custom_call.1} parent=1 // pred_check_branch
      %41 = sbr.rel (0) target = $region17
    $region16: #{tpu_custom_call.1} parent=1 // pred_region
      %42 = dma.done [#allocation6], 512
    $region17: #{tpu_custom_call.1} parent=1 // pred_fallthru
      _
    %v43 = vld [vmem:[#allocation2] sm:$0xff]
    %v44 = vld [vmem:[#allocation2 + $0x8] sm:$0xff]
    %v45 = vld [vmem:[#allocation2 + $0x10] sm:$0xff]
    %v46 = vld [vmem:[#allocation2 + $0x18] sm:$0xff]
    %v47 = vld [vmem:[#allocation5] sm:$0xff]
    %v48 = vld [vmem:[#allocation5 + $0x8] sm:$0xff]
    %v49 = vld [vmem:[#allocation5 + $0x10] sm:$0xff]
    %v50 = vld [vmem:[#allocation5 + $0x18] sm:$0xff]
    %v51 = vmax.f32 %v43, 0.0
    %v52 = vmax.f32 %v44, 0.0
    %v53 = vmax.f32 %v45, 0.0
    %v54 = vmax.f32 %v46, 0.0
    %v55 = vand.u32 2147483647, %v43
    %v56 = vand.u32 2147483647, %v44
    %v57 = vand.u32 2147483647, %v45
    %v58 = vand.u32 2147483647, %v46
    %v59 = vsub.f32 0.0, %v55
    %v60 = vsub.f32 0.0, %v56
    %v61 = vsub.f32 0.0, %v57
    %v62 = vsub.f32 0.0, %v58
    %v63 = vmul.f32 %v59, 1.442695
    %v64 = vpow.pop %v63
    %v65 = vmul.f32 %v60, 1.442695
    %v66 = vpow.pop %v65
    %v67 = vmul.f32 %v61, 1.442695
    %v68 = vpow.pop %v67
    %v69 = vmul.f32 %v62, 1.442695
    %v70 = vpow.pop %v69
    %v71 = vadd.f32 %v64, 1.0
    %v72 = vlog2.pop %v71
    %v73 = vmul.f32 %v72, 0.6931472
    %v74 = vmul.f32 -0.5, %v64
    %v75 = vadd.f32 %v74, 1.0
    %v76 = vmul.f32 %v75, %v64
    %v77 = vand.u32 2147483647, %v64
    %vm78 = vcmp.lt.f32.partialorder %v77, 0.0004427343
    %v79 = vsel %vm78, %v76, %v73
    %v80 = vadd.f32 %v66, 1.0
    %v81 = vlog2.pop %v80
    %v82 = vmul.f32 %v81, 0.6931472
    %v83 = vmul.f32 -0.5, %v66
    %v84 = vadd.f32 %v83, 1.0
    %v85 = vmul.f32 %v84, %v66
    %v86 = vand.u32 2147483647, %v66
    %vm87 = vcmp.lt.f32.partialorder %v86, 0.0004427343
    %v88 = vsel %vm87, %v85, %v82
    %v89 = vadd.f32 %v68, 1.0
    %v90 = vlog2.pop %v89
    %v91 = vmul.f32 %v90, 0.6931472
    %v92 = vmul.f32 -0.5, %v68
    %v93 = vadd.f32 %v92, 1.0
    %v94 = vmul.f32 %v93, %v68
    %v95 = vand.u32 2147483647, %v68
    %vm96 = vcmp.lt.f32.partialorder %v95, 0.0004427343
    %v97 = vsel %vm96, %v94, %v91
    %v98 = vadd.f32 %v70, 1.0
    %v99 = vlog2.pop %v98
    %v100 = vmul.f32 %v99, 0.6931472
    %v101 = vmul.f32 -0.5, %v70
    %v102 = vadd.f32 %v101, 1.0
    %v103 = vmul.f32 %v102, %v70
    %v104 = vand.u32 2147483647, %v70
    %vm105 = vcmp.lt.f32.partialorder %v104, 0.0004427343
    %v106 = vsel %vm105, %v103, %v100
    %v107 = vadd.f32 %v51, %v79
    %v108 = vadd.f32 %v52, %v88
    %v109 = vadd.f32 %v53, %v97
    %v110 = vadd.f32 %v54, %v106
    %v111 = vsub.f32 0.0, %v47
    %v112 = vsub.f32 0.0, %v48
    %v113 = vsub.f32 0.0, %v49
    %v114 = vsub.f32 0.0, %v50
    %v115 = vmax.f32 %v111, 0.0
    %v116 = vmax.f32 %v112, 0.0
    %v117 = vmax.f32 %v113, 0.0
    %v118 = vmax.f32 %v114, 0.0
    %v119 = vand.u32 2147483647, %v111
    %v120 = vand.u32 2147483647, %v112
    %v121 = vand.u32 2147483647, %v113
    %v122 = vand.u32 2147483647, %v114
    %v123 = vsub.f32 0.0, %v119
    %v124 = vsub.f32 0.0, %v120
    %v125 = vsub.f32 0.0, %v121
    %v126 = vsub.f32 0.0, %v122
    %v127 = vmul.f32 %v123, 1.442695
    %v128 = vpow.pop %v127
    %v129 = vmul.f32 %v124, 1.442695
    %v130 = vpow.pop %v129
    %v131 = vmul.f32 %v125, 1.442695
    %v132 = vpow.pop %v131
    %v133 = vmul.f32 %v126, 1.442695
    %v134 = vpow.pop %v133
    %v135 = vadd.f32 %v128, 1.0
    %v136 = vlog2.pop %v135
    %v137 = vmul.f32 %v136, 0.6931472
    %v138 = vmul.f32 -0.5, %v128
    %v139 = vadd.f32 %v138, 1.0
    %v140 = vmul.f32 %v139, %v128
    %v141 = vand.u32 2147483647, %v128
    %vm142 = vcmp.lt.f32.partialorder %v141, 0.0004427343
    %v143 = vsel %vm142, %v140, %v137
    %v144 = vadd.f32 %v130, 1.0
    %v145 = vlog2.pop %v144
    %v146 = vmul.f32 %v145, 0.6931472
    %v147 = vmul.f32 -0.5, %v130
    %v148 = vadd.f32 %v147, 1.0
    %v149 = vmul.f32 %v148, %v130
    %v150 = vand.u32 2147483647, %v130
    %vm151 = vcmp.lt.f32.partialorder %v150, 0.0004427343
    %v152 = vsel %vm151, %v149, %v146
    %v153 = vadd.f32 %v132, 1.0
    %v154 = vlog2.pop %v153
    %v155 = vmul.f32 %v154, 0.6931472
    %v156 = vmul.f32 -0.5, %v132
    %v157 = vadd.f32 %v156, 1.0
    %v158 = vmul.f32 %v157, %v132
    %v159 = vand.u32 2147483647, %v132
    %vm160 = vcmp.lt.f32.partialorder %v159, 0.0004427343
    %v161 = vsel %vm160, %v158, %v155
    %v162 = vadd.f32 %v134, 1.0
    %v163 = vlog2.pop %v162
    %v164 = vmul.f32 %v163, 0.6931472
    %v165 = vmul.f32 -0.5, %v134
    %v166 = vadd.f32 %v165, 1.0
    %v167 = vmul.f32 %v166, %v134
    %v168 = vand.u32 2147483647, %v134
    %vm169 = vcmp.lt.f32.partialorder %v168, 0.0004427343
    %v170 = vsel %vm169, %v167, %v164
    %v171 = vadd.f32 %v115, %v143
    %v172 = vadd.f32 %v116, %v152
    %v173 = vadd.f32 %v117, %v161
    %v174 = vadd.f32 %v118, %v170
    %v175 = vadd.f32 %v107, 0.0
    %v176 = vadd.f32 %v108, 0.0
    %v177 = vadd.f32 %v109, 0.0
    %v178 = vadd.f32 %v110, 0.0
    %179 = vst [vmem:[#allocation7] sm:$0xff] %v175
    %180 = vst [vmem:[#allocation7 + $0x8] sm:$0xff] %v176
    %181 = vst [vmem:[#allocation7 + $0x10] sm:$0xff] %v177
    %182 = vst [vmem:[#allocation7 + $0x18] sm:$0xff] %v178
    %v183 = vadd.f32 %v171, 0.0
    %v184 = vadd.f32 %v172, 0.0
    %v185 = vadd.f32 %v173, 0.0
    %v186 = vadd.f32 %v174, 0.0
    %187 = vst [vmem:[#allocation8] sm:$0xff] %v183
    %188 = vst [vmem:[#allocation8 + $0x8] sm:$0xff] %v184
    %189 = vst [vmem:[#allocation8 + $0x10] sm:$0xff] %v185
    %190 = vst [vmem:[#allocation8 + $0x18] sm:$0xff] %v186
    // Predicated region
    $region18: #{tpu_custom_call.1} parent=1 // pred_check
      _
    $region19: #{tpu_custom_call.1} parent=1 // pred_check_branch
      %192 = sbr.rel (0) target = $region21
    $region20: #{tpu_custom_call.1} parent=1 // pred_region
      %s194 = ssub.s32 512, 512
      %195 = vsyncadd [#allocation4], %s194
      %s196 = sshll.u32 [#allocation7], 4
      %s197 = int_to_ptr.vmem [resolvable:$true] %s196
      %202 = dma.vmem_to_hbm [thread:$0]  %s197, 512, %s2, [#allocation4], 128, 128, 8
    $region21: #{tpu_custom_call.1} parent=1 // pred_fallthru
      _
    // Predicated region
    $region22: #{tpu_custom_call.1} parent=1 // pred_check
      _
    $region23: #{tpu_custom_call.1} parent=1 // pred_check_branch
      %204 = sbr.rel (0) target = $region25
    $region24: #{tpu_custom_call.1} parent=1 // pred_region
      %s206 = ssub.s32 512, 512
      %207 = vsyncadd [#allocation9], %s206
      %s208 = sshll.u32 [#allocation8], 4
      %s209 = int_to_ptr.vmem [resolvable:$true] %s208
      %214 = dma.vmem_to_hbm [thread:$0]  %s209, 512, %s3, [#allocation9], 128, 128, 8
    $region25: #{tpu_custom_call.1} parent=1 // pred_fallthru
      _
    // Predicated region
    $region26: #{tpu_custom_call.1} parent=1 // pred_check
      _
    $region27: #{tpu_custom_call.1} parent=1 // pred_check_branch
      %216 = sbr.rel (0) target = $region29
    $region28: #{tpu_custom_call.1} parent=1 // pred_region
      %217 = dma.done [#allocation4], 512
    $region29: #{tpu_custom_call.1} parent=1 // pred_fallthru
      _
    // Predicated region
    $region30: #{tpu_custom_call.1} parent=1 // pred_check
      _
    $region31: #{tpu_custom_call.1} parent=1 // pred_check_branch
      %219 = sbr.rel (0) target = $region33
    $region32: #{tpu_custom_call.1} parent=1 // pred_region
      %220 = dma.done [#allocation9], 512
    $region33: #{tpu_custom_call.1} parent=1 // pred_fallthru
      _
    %221 = vsyncpa [#allocation3], 1
    %222 = vsyncpa [#allocation6], 1
    %223 = vsyncpa [#allocation4], 1
    %224 = vsyncpa [#allocation9], 1

</llo_original>
